<compile_context>
chip_gen: v6e
topology: v6e:2x2x1
jax: 0.10.0
libtpu: 0.0.40
codegen_flags: <defaults>
</compile_context>

<pallas_src>
import jax
import jax.numpy as jnp
from jax.experimental import pallas as pl
from jax.experimental.pallas import tpu as pltpu


def _copy_kernel(x_ref, o_ref):
    # Lane-dense, same-shape copy: (tile_r, lanes) -> (tile_r, lanes).
    o_ref[...] = x_ref[...]


def _row_granularity(dtype) -> int:
    # Sublane packing: 8 rows for 32-bit, 16 for 16-bit, 32 for 8-bit dtypes.
    itemsize = jnp.dtype(dtype).itemsize
    return max(8, 32 // max(1, itemsize))


def _pick_lane_width(total: int, max_lanes: int = 4096):
    """Largest multiple of 128 (<= max_lanes) that divides `total`, else None."""
    best = None
    lanes = 128
    while lanes <= max_lanes:
        if total % lanes == 0:
            best = lanes
        lanes += 128
    return best


def _pick_tile_rows(rows: int, row_bytes: int, gran: int,
                    target_block_bytes: int) -> int:
    """Row-tile: multiple of `gran`, ~target_block_bytes, prefers exact divisor
    of rows, and (when possible) leaves >= 2 grid steps for dual-TC sharding."""
    if rows <= gran:
        # Full-extent sublane dim satisfies the (8, 128) rule for tiny inputs.
        return rows
    max_tile = (target_block_bytes // max(1, row_bytes)) // gran * gran
    max_tile = max(gran, max_tile)
    max_tile = min(max_tile, (rows // gran) * gran)
    if rows >= 2 * gran:
        # Keep at least 2 grid steps so "parallel" can shard across 2 TCs (v7x).
        half = (rows // 2) // gran * gran
        if half >= gran:
            max_tile = min(max_tile, half)
    t = max_tile
    while t >= gran:
        if rows % t == 0:
            return t               # exact divisor: no ragged tail block
        t -= gran
    return max_tile                # ragged tail handled by pl.cdiv grid


def patcher(window: jax.Array, patch_len: int) -> jax.Array:
    """Pallas implementation of Patcher.forward.

    window: (B, C, window_size) array.
    returns: (B, C, patch_num, patch_len) array, same dtype (bit-exact copy).
    """
    b, c, w = window.shape
    assert w % patch_len == 0, "window size must be divisible by patch length"
    patch_num = w // patch_len
    out_shape4 = (b, c, patch_num, patch_len)

    # NOTE: the zero-cost implementation is simply `window.reshape(out_shape4)`.
    # The tiled, lane-dense copy below is kept because a kernel is required.

    total = b * c * w
    itemsize = jnp.dtype(window.dtype).itemsize
    gran = _row_granularity(window.dtype)
    target_block_bytes = 4 << 20  # ~4 MiB/block; 4 live buffers ~= 16 MiB scoped

    # Contiguous copy => the 2-D factorization is arbitrary: pick a lane width
    # that is a big multiple of 128 so every vreg is full and stores unmasked.
    lanes = _pick_lane_width(total)
    if lanes is not None:
        rows = total // lanes
    else:
        # Fallback: last dim is the full W extent (still legal per (8,128) rule).
        rows, lanes = b * c, w
    flat = window.reshape(rows, lanes)

    row_bytes = lanes * itemsize
    tile_r = _pick_tile_rows(rows, row_bytes, gran, target_block_bytes)
    grid = (pl.cdiv(rows, tile_r),)

    flat_out = pl.pallas_call(
        _copy_kernel,
        out_shape=jax.ShapeDtypeStruct((rows, lanes), window.dtype),
        grid=grid,
        in_specs=[pl.BlockSpec((tile_r, lanes), lambda i: (i, 0))],
        out_specs=pl.BlockSpec((tile_r, lanes), lambda i: (i, 0)),
        compiler_params=pltpu.CompilerParams(
            dimension_semantics=("parallel",),   # shards grid across TCs (v7x)
            vmem_limit_bytes=32 << 20,
        ),
        cost_estimate=pl.CostEstimate(
            flops=0, transcendentals=0,
            bytes_accessed=2 * total * itemsize),
    )(flat)

    # Free metadata reshape in the wrapper (kept off the lane axis in-kernel).
    return flat_out.reshape(out_shape4)


if __name__ == "__main__":
    key = jax.random.PRNGKey(0)

    # Case 1: shapes from the module spec; total=128 -> lane-dense (1, 128) path.
    B, C, WINDOW_SIZE, PATCH_LEN = 2, 4, 16, 4
    window = jax.random.normal(key, (B, C, WINDOW_SIZE), dtype=jnp.float32)
    out = jax.block_until_ready(patcher(window, PATCH_LEN))
    ref = window.reshape(B, C, WINDOW_SIZE // PATCH_LEN, PATCH_LEN)
    assert out.shape == ref.shape and out.dtype == window.dtype
    assert jnp.array_equal(out, ref), "Pallas output does not match reference"

    # Case 2: bf16 + total not divisible by 128 -> exercises the (b*c, W) fallback.
    B2, C2, W2, PL2 = 3, 5, 24, 8
    k2 = jax.random.PRNGKey(1)
    window2 = jax.random.normal(k2, (B2, C2, W2), dtype=jnp.bfloat16)
    out2 = jax.block_until_ready(patcher(window2, PL2))
    ref2 = window2.reshape(B2, C2, W2 // PL2, PL2)
    assert out2.shape == ref2.shape and out2.dtype == window2.dtype
    assert jnp.array_equal(out2, ref2), "Pallas output (bf16 fallback) mismatch"

    print("KERNEL_OK")
</pallas_src>

<mosaic_0001>
module attributes {stable_mosaic.version = 11 : i64} {
  func.func @_copy_kernel(%arg0: i32, %arg1: memref<1x128xf32, #tpu.memory_space<vmem>>, %arg2: memref<1x128xf32, #tpu.memory_space<vmem>>) attributes {dimension_semantics = [#tpu.dimension_semantics<parallel>], iteration_bounds = array<i64: 1>, scalar_prefetch = 0 : i64, scratch_operands = 0 : i64, tpu.core_type = #tpu.core_type<tc>, window_params = [{transform_indices = @transform_0, window_bounds = array<i64: 1, 128>}, {transform_indices = @transform_1, window_bounds = array<i64: 1, 128>}]} {
    %c0 = arith.constant 0 : index
    %c0_0 = arith.constant 0 : index
    %0 = vector.load %arg1[%c0, %c0_0] : memref<1x128xf32, #tpu.memory_space<vmem>>, vector<1x128xf32>
    %c0_1 = arith.constant 0 : index
    %c0_2 = arith.constant 0 : index
    %1 = vector.load %arg2[%c0_1, %c0_2] : memref<1x128xf32, #tpu.memory_space<vmem>>, vector<1x128xf32>
    tpu.vector_store %arg2[%c0_1, %c0_2], %0 {strides = array<i32>} : memref<1x128xf32, #tpu.memory_space<vmem>>, vector<1x128xf32>,
    return
  }
  func.func @transform_0(%arg0: i32) -> (i32, i32) {
    %c0_i32 = arith.constant 0 : i32
    %c0_i32_0 = arith.constant 0 : i32
    return %arg0, %c0_i32 : i32, i32
  }
  func.func @transform_1(%arg0: i32) -> (i32, i32) {
    %c0_i32 = arith.constant 0 : i32
    %c0_i32_0 = arith.constant 0 : i32
    return %arg0, %c0_i32 : i32, i32
  }
}

</mosaic_0001>

<llo_original>
// kernel: tpu_custom_call.1
$region0: #{tpu_custom_call.1}
  #allocation0 [shape = 'u32[]', space=smem, size = 0x4, offset = 0x4, fixed_abs, tag = 'smem constant byte address 0x4 - core index']
  #allocation1 [shape = 'u32[144,128]{1,0:T(1,128)}', space=vmem, size = 0x12000, scoped, tag = 'internal scratch']
  %s0 = inlined_call_operand.hbm [shape: f32[1,128], index: 0, kind: input, shape index: {}]
  %s1 = inlined_call_operand.hbm [shape: f32[1,128], index: 1, kind: output, shape index: {}]
  %s2 = sld [smem:[#allocation0]]
  $region18: #{tpu_custom_call.1} parent=0
    _
  %s4 = ssub.s32 1, %s2
  %s5 = scalar_select 0, %s4, %s2
  $region1: #{tpu_custom_call.1} parent=0
    #allocation2 [shape = 'u8[512]{0}', space=vmem, size = 0x400, scoped, tag = 'input window, operand 0, single buffered']
    #allocation3 [shape = 's32[1]{0}', space=sflag, size = 0x4, scoped, tag = 'scoped memory for tpu_custom_call.1']
    #allocation4 [shape = 's32[1]{0}', space=sflag, size = 0x4, scoped, tag = 'scoped memory for tpu_custom_call.1']
    #allocation5 [shape = 'u8[512]{0}', space=vmem, size = 0x400, scoped, tag = 'output window, operand 0, single buffered']
    %6 = vsyncpa [#allocation3], 0
    %7 = vsyncpa [#allocation4], 0
    // Predicated region
    $region2: #{tpu_custom_call.1} parent=1 // pred_check
      _
    $region3: #{tpu_custom_call.1} parent=1 // pred_check_branch
      %9 = sbr.rel (0) target = $region5
    $region4: #{tpu_custom_call.1} parent=1 // pred_region
      %s11 = ssub.s32 16, 16
      %12 = vsyncadd [#allocation3], %s11
      %s14 = sshll.u32 [#allocation2], 4
      %s15 = int_to_ptr.vmem [resolvable:$true] %s14
      %17 = dma.hbm_to_vmem [thread:$0]  %s0, 16, %s15, [#allocation3]
    $region5: #{tpu_custom_call.1} parent=1 // pred_fallthru
      _
    // Predicated region
    $region6: #{tpu_custom_call.1} parent=1 // pred_check
      _
    $region7: #{tpu_custom_call.1} parent=1 // pred_check_branch
      %19 = sbr.rel (0) target = $region9
    $region8: #{tpu_custom_call.1} parent=1 // pred_region
      %20 = dma.done [#allocation3], 16
    $region9: #{tpu_custom_call.1} parent=1 // pred_fallthru
      _
    %v21 = vld [vmem:[#allocation2] sm:$0x1]
    %22 = vst [vmem:[#allocation5] sm:$0x1] %v21
    // Predicated region
    $region10: #{tpu_custom_call.1} parent=1 // pred_check
      _
    $region11: #{tpu_custom_call.1} parent=1 // pred_check_branch
      %24 = sbr.rel (0) target = $region13
    $region12: #{tpu_custom_call.1} parent=1 // pred_region
      %s26 = ssub.s32 16, 16
      %27 = vsyncadd [#allocation4], %s26
      %s29 = sshll.u32 [#allocation5], 4
      %s30 = int_to_ptr.vmem [resolvable:$true] %s29
      %32 = dma.vmem_to_hbm [thread:$0]  %s30, 16, %s1, [#allocation4]
    $region13: #{tpu_custom_call.1} parent=1 // pred_fallthru
      _
    // Predicated region
    $region14: #{tpu_custom_call.1} parent=1 // pred_check
      _
    $region15: #{tpu_custom_call.1} parent=1 // pred_check_branch
      %34 = sbr.rel (0) target = $region17
    $region16: #{tpu_custom_call.1} parent=1 // pred_region
      %35 = dma.done [#allocation4], 16
    $region17: #{tpu_custom_call.1} parent=1 // pred_fallthru
      _
    %36 = vsyncpa [#allocation3], 1
    %37 = vsyncpa [#allocation4], 1

</llo_original>
